<compile_context>
chip_gen: v6e
topology: v6e:2x2x1
jax: 0.10.0
libtpu: 0.0.40
codegen_flags: <defaults>
</compile_context>

<pallas_src>
import functools

import jax
import jax.numpy as jnp
from jax import lax
from jax.experimental import pallas as pl
from jax.experimental.pallas import tpu as pltpu


def _neg_pearson_kernel(x_ref, y_ref, o_ref,
                        sx, sy, sxy, sx2, sy2, loss_sm,
                        *, n_true, b_true, split, valid_rows):
    i = pl.program_id(0)          # row-tile axis (outer)
    k = pl.program_id(1)          # lane / reduction axis (inner, "arbitrary")

    @pl.when(jnp.logical_and(i == 0, k == 0))
    def _():
        loss_sm[0] = jnp.float32(0.0)

    @pl.when(k == 0)
    def _():
        sx[...] = jnp.zeros_like(sx)
        sy[...] = jnp.zeros_like(sy)
        sxy[...] = jnp.zeros_like(sxy)
        sx2[...] = jnp.zeros_like(sx2)
        sy2[...] = jnp.zeros_like(sy2)

    x = x_ref[...].astype(jnp.float32)
    y = y_ref[...].astype(jnp.float32)

    # Elementwise products on the VPU, lane reductions on the XLU; both hide
    # under the HBM DMA of the next (Rt, tk) tile.
    sx[...] += jnp.sum(x, axis=1, keepdims=True)
    sy[...] += jnp.sum(y, axis=1, keepdims=True)
    sxy[...] += jnp.sum(x * y, axis=1, keepdims=True)
    sx2[...] += jnp.sum(x * x, axis=1, keepdims=True)
    sy2[...] += jnp.sum(y * y, axis=1, keepdims=True)

    @pl.when(k == pl.num_programs(1) - 1)
    def _():
        def pearson_of(sum_x, sum_y, sum_xy, sum_x2, sum_y2):
            n = jnp.float32(n_true)   # original N = preds.shape[1], as in PyTorch
            num = n * sum_xy - sum_x * sum_y
            den = (n * sum_x2 - sum_x * sum_x) * (n * sum_y2 - sum_y * sum_y)
            return num * lax.rsqrt(den)          # EUP rsqrt (no VPU divide)

        if split > 1:
            # Only reachable with a single row tile: regroup the (B*split, 1)
            # sub-row sums back to (B, 1) per-row sums with a tiny static
            # selection-matrix matmul (runs once).
            rows = b_true * split
            grp_id = lax.broadcasted_iota(jnp.int32, (b_true, rows), 0)
            sub_id = lax.broadcasted_iota(jnp.int32, (b_true, rows), 1)
            sel = jnp.logical_and(sub_id >= grp_id * split,
                                  sub_id < (grp_id + 1) * split
                                  ).astype(jnp.float32)          # (B, B*split)

            def group(ref):
                return jnp.dot(sel, ref[...],
                               preferred_element_type=jnp.float32)  # (B, 1)

            pearson = pearson_of(group(sx), group(sy), group(sxy),
                                 group(sx2), group(sy2))
            contrib = jnp.sum(1.0 - pearson)
        else:
            rows = sx.shape[0]
            pearson = pearson_of(sx[...], sy[...], sxy[...], sx2[...], sy2[...])
            # Mask zero-padded rows (their 0/0 Pearson is NaN; select drops it).
            row_id = lax.broadcasted_iota(jnp.int32, (rows, 1), 0) + i * rows
            contrib = jnp.sum(jnp.where(row_id < valid_rows,
                                        1.0 - pearson, 0.0))

        new_loss = loss_sm[0] + contrib
        loss_sm[0] = new_loss

        @pl.when(i == pl.num_programs(0) - 1)
        def _():
            o_ref[0, 0] = new_loss / jnp.float32(b_true)


def _round_up(x: int, m: int) -> int:
    return (x + m - 1) // m * m


def _cdiv(a: int, b: int) -> int:
    return (a + b - 1) // b


def neg_pearson(preds: jax.Array, labels: jax.Array, *,
                vmem_budget_bytes: int = 8 * 1024 * 1024,
                max_lane_tile: int | None = None,
                row_tile: int = 256,
                target_sublanes: int = 8) -> jax.Array:
    """preds, labels: (B, N). Returns scalar f32 loss = mean_i (1 - pearson_i)."""
    assert preds.shape == labels.shape and preds.ndim == 2
    B, N = preds.shape
    itemsize = preds.dtype.itemsize

    # ---- sublane-dense layout: split long rows when B is tiny -----------------
    n128 = _round_up(N, 128)          # lane-pad the signal axis
    m = n128 // 128
    r = 1
    if B < target_sublanes:           # split each row into r sub-rows
        divisors = [d for d in range(1, m + 1) if m % d == 0]
        cands = [d for d in divisors if B * d >= target_sublanes]
        r = cands[0] if cands else divisors[-1]
    R = B * r                         # rows presented to the kernel
    L = n128 // r                     # sub-row length (multiple of 128)

    # ---- row tiling (only when rows were not split and B is large) ------------
    row_tile = max(8, (row_tile // 8) * 8)
    if r == 1 and R > row_tile:
        Rt = row_tile
        R_pad = _round_up(R, Rt)
    else:
        Rt = R
        R_pad = R
    num_i = R_pad // Rt

    # ---- lane tile: as large as possible, double-buffered inputs <= budget ----
    cap = max(128, (vmem_budget_bytes // (4 * Rt * itemsize)) // 128 * 128)
    if max_lane_tile is not None:
        cap = min(cap, max(128, (max_lane_tile // 128) * 128))
    num_k = _cdiv(L, cap)
    tk = _round_up(_cdiv(L, num_k), 128)   # <= cap, multiple of 128
    Lp = num_k * tk

    # ---- zero-pad (does not change any of the five sums) and reshape ----------
    n_total = r * Lp
    if n_total != N:
        pad = n_total - N
        preds = jnp.pad(preds, ((0, 0), (0, pad)))
        labels = jnp.pad(labels, ((0, 0), (0, pad)))
    x2d = preds.reshape(R, Lp)
    y2d = labels.reshape(R, Lp)
    if R_pad != R:
        x2d = jnp.pad(x2d, ((0, R_pad - R), (0, 0)))
        y2d = jnp.pad(y2d, ((0, R_pad - R), (0, 0)))

    kernel = functools.partial(_neg_pearson_kernel, n_true=N, b_true=B,
                               split=r, valid_rows=R)

    out = pl.pallas_call(
        kernel,
        out_shape=jax.ShapeDtypeStruct((1, 1), jnp.float32),
        grid_spec=pltpu.PrefetchScalarGridSpec(
            num_scalar_prefetch=0,
            grid=(num_i, num_k),                       # reduction axis last
            in_specs=[
                pl.BlockSpec((Rt, tk), lambda i, k: (i, k)),
                pl.BlockSpec((Rt, tk), lambda i, k: (i, k)),
            ],
            out_specs=pl.BlockSpec(memory_space=pltpu.SMEM),
            scratch_shapes=[pltpu.VMEM((Rt, 1), jnp.float32) for _ in range(5)]
                          + [pltpu.SMEM((1,), jnp.float32)],
        ),
        compiler_params=pltpu.CompilerParams(
            # Both axes carry accumulators (per-row sums / running loss).
            dimension_semantics=("arbitrary", "arbitrary"),
        ),
        cost_estimate=pl.CostEstimate(
            flops=int(10 * B * N),
            transcendentals=int(B),
            bytes_accessed=int(2 * R_pad * Lp * itemsize + 4),
        ),
    )(x2d, y2d)
    return out[0, 0]


def _reference(preds, labels):
    # Pure-JAX reference mirroring the PyTorch forward exactly.
    x = preds.astype(jnp.float32)
    y = labels.astype(jnp.float32)
    n = x.shape[1]
    sum_x = jnp.sum(x, axis=1)
    sum_y = jnp.sum(y, axis=1)
    sum_xy = jnp.sum(x * y, axis=1)
    sum_x2 = jnp.sum(x * x, axis=1)
    sum_y2 = jnp.sum(y * y, axis=1)
    pearson = (n * sum_xy - sum_x * sum_y) / jnp.sqrt(
        (n * sum_x2 - sum_x ** 2) * (n * sum_y2 - sum_y ** 2)
    )
    return jnp.mean(1.0 - pearson)


if __name__ == "__main__":
    key = jax.random.PRNGKey(0)

    def make(k, B, N, dtype):
        k1, k2 = jax.random.split(k)
        p = jax.random.normal(k1, (B, N), dtype=jnp.float32)
        l = 0.7 * p + 0.3 * jax.random.normal(k2, (B, N), dtype=jnp.float32)
        return p.astype(dtype), l.astype(dtype)

    cases = [
        # (name, B, N, dtype, kwargs)
        ("small-B f32, forced multi-step lane grid", 2, 2048, jnp.float32,
         dict(max_lane_tile=256)),
        ("small-B f32, default (single big lane tile)", 2, 2048, jnp.float32,
         dict()),
        ("B=8, N not multiple of 128 (lane padding)", 8, 300, jnp.float32,
         dict()),
        ("bf16 inputs (half HBM traffic)", 4, 1024, jnp.bfloat16, dict()),
        ("row-tiled path with padded + masked rows", 20, 384, jnp.float32,
         dict(row_tile=8, max_lane_tile=128)),
    ]
    keys = jax.random.split(key, len(cases))
    for (name, B, N, dtype, kw), k in zip(cases, keys):
        preds, labels = make(k, B, N, dtype)
        loss = jax.block_until_ready(neg_pearson(preds, labels, **kw))
        ref = jax.block_until_ready(_reference(preds, labels))
        assert jnp.allclose(loss, ref, atol=1e-4, rtol=1e-4), (name, loss, ref)
    print("KERNEL_OK")
</pallas_src>

<mosaic_0001>
module attributes {stable_mosaic.version = 11 : i64} {
  func.func @_neg_pearson_kernel(%arg0: i32, %arg1: i32, %arg2: memref<8x256xf32, #tpu.memory_space<vmem>>, %arg3: memref<8x256xf32, #tpu.memory_space<vmem>>, %arg4: memref<1x1xf32, #tpu.memory_space<smem>>, %arg5: memref<8x1xf32, #tpu.memory_space<vmem>>, %arg6: memref<8x1xf32, #tpu.memory_space<vmem>>, %arg7: memref<8x1xf32, #tpu.memory_space<vmem>>, %arg8: memref<8x1xf32, #tpu.memory_space<vmem>>, %arg9: memref<8x1xf32, #tpu.memory_space<vmem>>, %arg10: memref<1xf32, #tpu.memory_space<smem>>) attributes {dimension_semantics = [#tpu.dimension_semantics<arbitrary>, #tpu.dimension_semantics<arbitrary>], iteration_bounds = array<i64: 1, 2>, scalar_prefetch = 0 : i64, scratch_operands = 6 : i64, tpu.core_type = #tpu.core_type<tc>, window_params = [{transform_indices = @transform_0, window_bounds = array<i64: 8, 256>}, {transform_indices = @transform_1, window_bounds = array<i64: 8, 256>}, {transform_indices = @transform_2, window_bounds = array<i64: 1, 1>}]} {
    %c0_i32 = arith.constant 0 : i32
    %0 = arith.cmpi eq, %arg0, %c0_i32 : i32
    %c0_i32_0 = arith.constant 0 : i32
    %1 = arith.cmpi eq, %arg1, %c0_i32_0 : i32
    %2 = arith.andi %0, %1 : i1
    %3 = arith.extui %2 : i1 to i32
    %c0_i32_1 = arith.constant 0 : i32
    %4 = arith.cmpi ne, %3, %c0_i32_1 : i32
    scf.if %4 {
      %cst_32 = arith.constant 0.000000e+00 : f32
      %c0_33 = arith.constant 0 : index
      %41 = memref.load %arg10[%c0_33] : memref<1xf32, #tpu.memory_space<smem>>
      memref.store %cst_32, %arg10[%c0_33] : memref<1xf32, #tpu.memory_space<smem>>
    } else {
    }
    %c0_i32_2 = arith.constant 0 : i32
    %5 = arith.cmpi eq, %arg1, %c0_i32_2 : i32
    %6 = arith.extui %5 : i1 to i32
    %c0_i32_3 = arith.constant 0 : i32
    %7 = arith.cmpi ne, %6, %c0_i32_3 : i32
    scf.if %7 {
      %cst_32 = arith.constant 0.000000e+00 : f32
      %41 = vector.broadcast %cst_32 : f32 to vector<8x1xf32>
      %c0_33 = arith.constant 0 : index
      %c0_34 = arith.constant 0 : index
      %42 = vector.load %arg5[%c0_33, %c0_34] : memref<8x1xf32, #tpu.memory_space<vmem>>, vector<8x1xf32>
      tpu.vector_store %arg5[%c0_33, %c0_34], %41 {strides = array<i32>} : memref<8x1xf32, #tpu.memory_space<vmem>>, vector<8x1xf32>,
      %cst_35 = arith.constant 0.000000e+00 : f32
      %43 = vector.broadcast %cst_35 : f32 to vector<8x1xf32>
      %c0_36 = arith.constant 0 : index
      %c0_37 = arith.constant 0 : index
      %44 = vector.load %arg6[%c0_36, %c0_37] : memref<8x1xf32, #tpu.memory_space<vmem>>, vector<8x1xf32>
      tpu.vector_store %arg6[%c0_36, %c0_37], %43 {strides = array<i32>} : memref<8x1xf32, #tpu.memory_space<vmem>>, vector<8x1xf32>,
      %cst_38 = arith.constant 0.000000e+00 : f32
      %45 = vector.broadcast %cst_38 : f32 to vector<8x1xf32>
      %c0_39 = arith.constant 0 : index
      %c0_40 = arith.constant 0 : index
      %46 = vector.load %arg7[%c0_39, %c0_40] : memref<8x1xf32, #tpu.memory_space<vmem>>, vector<8x1xf32>
      tpu.vector_store %arg7[%c0_39, %c0_40], %45 {strides = array<i32>} : memref<8x1xf32, #tpu.memory_space<vmem>>, vector<8x1xf32>,
      %cst_41 = arith.constant 0.000000e+00 : f32
      %47 = vector.broadcast %cst_41 : f32 to vector<8x1xf32>
      %c0_42 = arith.constant 0 : index
      %c0_43 = arith.constant 0 : index
      %48 = vector.load %arg8[%c0_42, %c0_43] : memref<8x1xf32, #tpu.memory_space<vmem>>, vector<8x1xf32>
      tpu.vector_store %arg8[%c0_42, %c0_43], %47 {strides = array<i32>} : memref<8x1xf32, #tpu.memory_space<vmem>>, vector<8x1xf32>,
      %cst_44 = arith.constant 0.000000e+00 : f32
      %49 = vector.broadcast %cst_44 : f32 to vector<8x1xf32>
      %c0_45 = arith.constant 0 : index
      %c0_46 = arith.constant 0 : index
      %50 = vector.load %arg9[%c0_45, %c0_46] : memref<8x1xf32, #tpu.memory_space<vmem>>, vector<8x1xf32>
      tpu.vector_store %arg9[%c0_45, %c0_46], %49 {strides = array<i32>} : memref<8x1xf32, #tpu.memory_space<vmem>>, vector<8x1xf32>,
    } else {
    }
    %c0 = arith.constant 0 : index
    %c0_4 = arith.constant 0 : index
    %8 = vector.load %arg2[%c0, %c0_4] : memref<8x256xf32, #tpu.memory_space<vmem>>, vector<8x256xf32>
    %c0_5 = arith.constant 0 : index
    %c0_6 = arith.constant 0 : index
    %9 = vector.load %arg3[%c0_5, %c0_6] : memref<8x256xf32, #tpu.memory_space<vmem>>, vector<8x256xf32>
    %c0_7 = arith.constant 0 : index
    %c0_8 = arith.constant 0 : index
    %10 = vector.load %arg5[%c0_7, %c0_8] : memref<8x1xf32, #tpu.memory_space<vmem>>, vector<8x1xf32>
    %cst = arith.constant dense<0.000000e+00> : vector<8xf32>
    %11 = vector.multi_reduction <add>, %8, %cst [1] : vector<8x256xf32> to vector<8xf32>
    %12 = vector.shape_cast %11 : vector<8xf32> to vector<8x1xf32>
    %13 = arith.addf %10, %12 : vector<8x1xf32>
    %c0_9 = arith.constant 0 : index
    %c0_10 = arith.constant 0 : index
    %14 = vector.load %arg5[%c0_9, %c0_10] : memref<8x1xf32, #tpu.memory_space<vmem>>, vector<8x1xf32>
    tpu.vector_store %arg5[%c0_9, %c0_10], %13 {strides = array<i32>} : memref<8x1xf32, #tpu.memory_space<vmem>>, vector<8x1xf32>,
    %c0_11 = arith.constant 0 : index
    %c0_12 = arith.constant 0 : index
    %15 = vector.load %arg6[%c0_11, %c0_12] : memref<8x1xf32, #tpu.memory_space<vmem>>, vector<8x1xf32>
    %cst_13 = arith.constant dense<0.000000e+00> : vector<8xf32>
    %16 = vector.multi_reduction <add>, %9, %cst_13 [1] : vector<8x256xf32> to vector<8xf32>
    %17 = vector.shape_cast %16 : vector<8xf32> to vector<8x1xf32>
    %18 = arith.addf %15, %17 : vector<8x1xf32>
    %c0_14 = arith.constant 0 : index
    %c0_15 = arith.constant 0 : index
    %19 = vector.load %arg6[%c0_14, %c0_15] : memref<8x1xf32, #tpu.memory_space<vmem>>, vector<8x1xf32>
    tpu.vector_store %arg6[%c0_14, %c0_15], %18 {strides = array<i32>} : memref<8x1xf32, #tpu.memory_space<vmem>>, vector<8x1xf32>,
    %c0_16 = arith.constant 0 : index
    %c0_17 = arith.constant 0 : index
    %20 = vector.load %arg7[%c0_16, %c0_17] : memref<8x1xf32, #tpu.memory_space<vmem>>, vector<8x1xf32>
    %21 = arith.mulf %8, %9 : vector<8x256xf32>
    %cst_18 = arith.constant dense<0.000000e+00> : vector<8xf32>
    %22 = vector.multi_reduction <add>, %21, %cst_18 [1] : vector<8x256xf32> to vector<8xf32>
    %23 = vector.shape_cast %22 : vector<8xf32> to vector<8x1xf32>
    %24 = arith.addf %20, %23 : vector<8x1xf32>
    %c0_19 = arith.constant 0 : index
    %c0_20 = arith.constant 0 : index
    %25 = vector.load %arg7[%c0_19, %c0_20] : memref<8x1xf32, #tpu.memory_space<vmem>>, vector<8x1xf32>
    tpu.vector_store %arg7[%c0_19, %c0_20], %24 {strides = array<i32>} : memref<8x1xf32, #tpu.memory_space<vmem>>, vector<8x1xf32>,
    %c0_21 = arith.constant 0 : index
    %c0_22 = arith.constant 0 : index
    %26 = vector.load %arg8[%c0_21, %c0_22] : memref<8x1xf32, #tpu.memory_space<vmem>>, vector<8x1xf32>
    %27 = arith.mulf %8, %8 : vector<8x256xf32>
    %cst_23 = arith.constant dense<0.000000e+00> : vector<8xf32>
    %28 = vector.multi_reduction <add>, %27, %cst_23 [1] : vector<8x256xf32> to vector<8xf32>
    %29 = vector.shape_cast %28 : vector<8xf32> to vector<8x1xf32>
    %30 = arith.addf %26, %29 : vector<8x1xf32>
    %c0_24 = arith.constant 0 : index
    %c0_25 = arith.constant 0 : index
    %31 = vector.load %arg8[%c0_24, %c0_25] : memref<8x1xf32, #tpu.memory_space<vmem>>, vector<8x1xf32>
    tpu.vector_store %arg8[%c0_24, %c0_25], %30 {strides = array<i32>} : memref<8x1xf32, #tpu.memory_space<vmem>>, vector<8x1xf32>,
    %c0_26 = arith.constant 0 : index
    %c0_27 = arith.constant 0 : index
    %32 = vector.load %arg9[%c0_26, %c0_27] : memref<8x1xf32, #tpu.memory_space<vmem>>, vector<8x1xf32>
    %33 = arith.mulf %9, %9 : vector<8x256xf32>
    %cst_28 = arith.constant dense<0.000000e+00> : vector<8xf32>
    %34 = vector.multi_reduction <add>, %33, %cst_28 [1] : vector<8x256xf32> to vector<8xf32>
    %35 = vector.shape_cast %34 : vector<8xf32> to vector<8x1xf32>
    %36 = arith.addf %32, %35 : vector<8x1xf32>
    %c0_29 = arith.constant 0 : index
    %c0_30 = arith.constant 0 : index
    %37 = vector.load %arg9[%c0_29, %c0_30] : memref<8x1xf32, #tpu.memory_space<vmem>>, vector<8x1xf32>
    tpu.vector_store %arg9[%c0_29, %c0_30], %36 {strides = array<i32>} : memref<8x1xf32, #tpu.memory_space<vmem>>, vector<8x1xf32>,
    %c1_i32 = arith.constant 1 : i32
    %38 = arith.cmpi eq, %arg1, %c1_i32 : i32
    %39 = arith.extui %38 : i1 to i32
    %c0_i32_31 = arith.constant 0 : i32
    %40 = arith.cmpi ne, %39, %c0_i32_31 : i32
    scf.if %40 {
      %41 = tpu.iota {dimensions = array<i32: 0>} : vector<2x8xi32>
      %42 = tpu.iota {dimensions = array<i32: 1>} : vector<2x8xi32>
      %c4_i32 = arith.constant 4 : i32
      %43 = vector.broadcast %c4_i32 : i32 to vector<2x8xi32>
      %44 = arith.muli %41, %43 : vector<2x8xi32>
      %45 = arith.cmpi sge, %42, %44 : vector<2x8xi32>
      %c1_i32_32 = arith.constant 1 : i32
      %46 = vector.broadcast %c1_i32_32 : i32 to vector<2x8xi32>
      %47 = arith.addi %41, %46 : vector<2x8xi32>
      %c4_i32_33 = arith.constant 4 : i32
      %48 = vector.broadcast %c4_i32_33 : i32 to vector<2x8xi32>
      %49 = arith.muli %47, %48 : vector<2x8xi32>
      %50 = arith.cmpi slt, %42, %49 : vector<2x8xi32>
      %51 = arith.andi %45, %50 : vector<2x8xi1>
      %52 = arith.extui %51 : vector<2x8xi1> to vector<2x8xi32>
      %53 = arith.sitofp %52 : vector<2x8xi32> to vector<2x8xf32>
      %c0_34 = arith.constant 0 : index
      %c0_35 = arith.constant 0 : index
      %54 = vector.load %arg5[%c0_34, %c0_35] : memref<8x1xf32, #tpu.memory_space<vmem>>, vector<8x1xf32>
      %cst_36 = arith.constant dense<0.000000e+00> : vector<2x1xf32>
      %55 = tpu.matmul %53, %54, %cst_36 {dimension_numbers = #tpu.dot_dimension_numbers<[1], [0], [0], [1], [0, 0, 1, 1], [], []>} : vector<2x8xf32>, vector<8x1xf32>, vector<2x1xf32> -> vector<2x1xf32>
      %c0_37 = arith.constant 0 : index
      %c0_38 = arith.constant 0 : index
      %56 = vector.load %arg6[%c0_37, %c0_38] : memref<8x1xf32, #tpu.memory_space<vmem>>, vector<8x1xf32>
      %cst_39 = arith.constant dense<0.000000e+00> : vector<2x1xf32>
      %57 = tpu.matmul %53, %56, %cst_39 {dimension_numbers = #tpu.dot_dimension_numbers<[1], [0], [0], [1], [0, 0, 1, 1], [], []>} : vector<2x8xf32>, vector<8x1xf32>, vector<2x1xf32> -> vector<2x1xf32>
      %c0_40 = arith.constant 0 : index
      %c0_41 = arith.constant 0 : index
      %58 = vector.load %arg7[%c0_40, %c0_41] : memref<8x1xf32, #tpu.memory_space<vmem>>, vector<8x1xf32>
      %cst_42 = arith.constant dense<0.000000e+00> : vector<2x1xf32>
      %59 = tpu.matmul %53, %58, %cst_42 {dimension_numbers = #tpu.dot_dimension_numbers<[1], [0], [0], [1], [0, 0, 1, 1], [], []>} : vector<2x8xf32>, vector<8x1xf32>, vector<2x1xf32> -> vector<2x1xf32>
      %c0_43 = arith.constant 0 : index
      %c0_44 = arith.constant 0 : index
      %60 = vector.load %arg8[%c0_43, %c0_44] : memref<8x1xf32, #tpu.memory_space<vmem>>, vector<8x1xf32>
      %cst_45 = arith.constant dense<0.000000e+00> : vector<2x1xf32>
      %61 = tpu.matmul %53, %60, %cst_45 {dimension_numbers = #tpu.dot_dimension_numbers<[1], [0], [0], [1], [0, 0, 1, 1], [], []>} : vector<2x8xf32>, vector<8x1xf32>, vector<2x1xf32> -> vector<2x1xf32>
      %c0_46 = arith.constant 0 : index
      %c0_47 = arith.constant 0 : index
      %62 = vector.load %arg9[%c0_46, %c0_47] : memref<8x1xf32, #tpu.memory_space<vmem>>, vector<8x1xf32>
      %cst_48 = arith.constant dense<0.000000e+00> : vector<2x1xf32>
      %63 = tpu.matmul %53, %62, %cst_48 {dimension_numbers = #tpu.dot_dimension_numbers<[1], [0], [0], [1], [0, 0, 1, 1], [], []>} : vector<2x8xf32>, vector<8x1xf32>, vector<2x1xf32> -> vector<2x1xf32>
      %cst_49 = arith.constant 2.048000e+03 : f32
      %64 = vector.broadcast %cst_49 : f32 to vector<2x1xf32>
      %65 = arith.mulf %64, %59 : vector<2x1xf32>
      %66 = arith.mulf %55, %57 : vector<2x1xf32>
      %67 = arith.subf %65, %66 : vector<2x1xf32>
      %cst_50 = arith.constant 2.048000e+03 : f32
      %68 = vector.broadcast %cst_50 : f32 to vector<2x1xf32>
      %69 = arith.mulf %68, %61 : vector<2x1xf32>
      %70 = arith.mulf %55, %55 : vector<2x1xf32>
      %71 = arith.subf %69, %70 : vector<2x1xf32>
      %cst_51 = arith.constant 2.048000e+03 : f32
      %72 = vector.broadcast %cst_51 : f32 to vector<2x1xf32>
      %73 = arith.mulf %72, %63 : vector<2x1xf32>
      %74 = arith.mulf %57, %57 : vector<2x1xf32>
      %75 = arith.subf %73, %74 : vector<2x1xf32>
      %76 = arith.mulf %71, %75 : vector<2x1xf32>
      %77 = math.rsqrt %76 : vector<2x1xf32>
      %78 = arith.mulf %67, %77 : vector<2x1xf32>
      %cst_52 = arith.constant 1.000000e+00 : f32
      %79 = vector.broadcast %cst_52 : f32 to vector<2x1xf32>
      %80 = arith.subf %79, %78 : vector<2x1xf32>
      %81 = vector.shape_cast %80 : vector<2x1xf32> to vector<1x2x1xf32>
      %cst_53 = arith.constant dense<0.000000e+00> : vector<1xf32>
      %82 = vector.multi_reduction <add>, %81, %cst_53 [1, 2] : vector<1x2x1xf32> to vector<1xf32>
      %83 = vector.shape_cast %82 : vector<1xf32> to vector<1x1x1xf32>
      %84 = vector.extract %83[0, 0, 0] : f32 from vector<1x1x1xf32>
      %c0_54 = arith.constant 0 : index
      %85 = memref.load %arg10[%c0_54] : memref<1xf32, #tpu.memory_space<smem>>
      %86 = arith.addf %85, %84 : f32
      %c0_55 = arith.constant 0 : index
      %87 = memref.load %arg10[%c0_55] : memref<1xf32, #tpu.memory_space<smem>>
      memref.store %86, %arg10[%c0_55] : memref<1xf32, #tpu.memory_space<smem>>
      %c0_i32_56 = arith.constant 0 : i32
      %88 = arith.cmpi eq, %arg0, %c0_i32_56 : i32
      %89 = arith.extui %88 : i1 to i32
      %c0_i32_57 = arith.constant 0 : i32
      %90 = arith.cmpi ne, %89, %c0_i32_57 : i32
      scf.if %90 {
        %cst_58 = arith.constant 2.000000e+00 : f32
        %91 = arith.divf %86, %cst_58 : f32
        %c0_59 = arith.constant 0 : index
        %c0_60 = arith.constant 0 : index
        %92 = memref.load %arg4[%c0_59, %c0_60] : memref<1x1xf32, #tpu.memory_space<smem>>
        memref.store %91, %arg4[%c0_59, %c0_60] : memref<1x1xf32, #tpu.memory_space<smem>>
      } else {
      }
    } else {
    }
    return
  }
  func.func @transform_0(%arg0: i32, %arg1: i32) -> (i32, i32) {
    %c0_i32 = arith.constant 0 : i32
    return %arg0, %arg1 : i32, i32
  }
  func.func @transform_1(%arg0: i32, %arg1: i32) -> (i32, i32) {
    %c0_i32 = arith.constant 0 : i32
    return %arg0, %arg1 : i32, i32
  }
  func.func @transform_2(%arg0: i32, %arg1: i32) -> (i32, i32) {
    %c0_i32 = arith.constant 0 : i32
    %c0_i32_0 = arith.constant 0 : i32
    %c0_i32_1 = arith.constant 0 : i32
    return %c0_i32, %c0_i32_0 : i32, i32
  }
}

</mosaic_0001>

<llo_original>
// kernel: tpu_custom_call.1
$region0: #{tpu_custom_call.1}
  #allocation0 [shape = 'u32[]', space=smem, size = 0x4, offset = 0x4, fixed_abs, tag = 'smem constant byte address 0x4 - core index']
  #allocation1 [shape = 'u32[144,128]{1,0:T(1,128)}', space=vmem, size = 0x12000, scoped, tag = 'internal scratch']
  #allocation2 [shape = 'f32[8,1]{1,0:T(8,128)}', space=vmem, size = 0x1000, scoped, tag = 'scratch operand']
  #allocation3 [shape = 'f32[8,1]{1,0:T(8,128)}', space=vmem, size = 0x1000, scoped, tag = 'scratch operand']
  #allocation4 [shape = 'f32[8,1]{1,0:T(8,128)}', space=vmem, size = 0x1000, scoped, tag = 'scratch operand']
  #allocation5 [shape = 'f32[8,1]{1,0:T(8,128)}', space=vmem, size = 0x1000, scoped, tag = 'scratch operand']
  #allocation6 [shape = 'f32[8,1]{1,0:T(8,128)}', space=vmem, size = 0x1000, scoped, tag = 'scratch operand']
  #allocation7 [shape = 'f32[1]{0:T(128)}', space=smem, size = 0x200, scoped, tag = 'scratch operand']
  %s0 = inlined_call_operand.hbm [shape: f32[8,512], index: 0, kind: input, shape index: {}]
  %s1 = inlined_call_operand.hbm [shape: f32[8,512], index: 1, kind: input, shape index: {}]
  %s2 = inlined_call_operand.hbm [shape: f32[1,1], index: 2, kind: output, shape index: {}]
  %s3 = sld [smem:[#allocation0]]
  $region65: #{tpu_custom_call.1} parent=0
    _
  %s5 = ssub.s32 1, %s3
  %s6 = scalar_select 0, %s5, %s3
  $region1: #{tpu_custom_call.1} parent=0
    #allocation8 [shape = 'u8[16384]{0}', space=vmem, size = 0x4000, scoped, tag = 'input window, operand 0']
    #allocation9 [shape = 's32[2]{0}', space=sflag, size = 0x8, scoped, tag = 'scoped memory for tpu_custom_call.1']
    #allocation10 [shape = 's32[2]{0}', space=sflag, size = 0x8, scoped, tag = 'scoped memory for tpu_custom_call.1']
    #allocation11 [shape = 'u8[16384]{0}', space=vmem, size = 0x4000, scoped, tag = 'input window, operand 1']
    #allocation12 [shape = 's32[2]{0}', space=sflag, size = 0x8, scoped, tag = 'scoped memory for tpu_custom_call.1']
    #allocation13 [shape = 'u8[512]{0}', space=smem, size = 0x200, scoped, tag = 'output window, operand 0, single buffered']
    %7 = vsyncpa [#allocation9], 0
    %s8 = scalar_lea.sflag [#allocation9], 1
    %9 = vsyncpa %s8, 0
    %10 = vsyncpa [#allocation12], 0
    %s11 = scalar_lea.sflag [#allocation12], 1
    %12 = vsyncpa %s11, 0
    %13 = vsyncpa [#allocation10], 0
    loop: start=0, step=1, limit=4
    $region2: #{tpu_custom_call.1} parent=1 // loop_pre_header
      _
    $region3: #{tpu_custom_call.1} parent=1 // loop_header
      %s15 = sphi 0, %s19
      %p16 = scmp.ge.s32.totalorder %s15, 4
      %s22 = sphi 0, %s34
      %s23 = sphi 0, %s30
      %s24 = sphi 0, %s22
      %s25 = sphi 0, %s23
      %s26 = sphi 0, %s24
      %s27 = sphi 0, %s25
      %s39 = sphi 0, %s41
      %s42 = sphi 0, %s39
      %s43 = sphi 0, %s42
      %s59 = sphi 0, %s43
      %s67 = sphi 0, %s69
      %s70 = sphi 0, %s67
      %s71 = sphi 0, %s70
      %s87 = sphi 0, %s71
      %s91 = sphi 0, %s91
      %s93 = sphi 0, %s91
      %s94 = sphi 0, %s93
      %s108 = sphi 0, %s94
    $region4: #{tpu_custom_call.1} parent=1 // loop_header_branch
      %18 = sbr.rel (%p16) target = $region8
    $region5: #{tpu_custom_call.1} parent=1 // loop_body
      %s20 = ssub.s32 %s15, 1
      %s21 = ssub.s32 %s15, 2
      %s28 = sadd.s32 1, %s23
      %p29 = scmp.ge.s32.totalorder %s28, 2
      %s30 = scalar_select %p29, 0, %s28
      %s31 = sadd.s32 1, %s22
      %s32 = scalar_select %p29, %s31, %s22
      %p33 = scmp.ge.s32.totalorder %s32, 1
      %s34 = scalar_select %p33, 0, %s32
      %s35 = ssub.s32 %s22, %s34
      %s36 = ssub.s32 %s23, %s30
      %s37 = sor.u32 %s35, %s36
      %p38 = scmp.eq.s32.totalorder %s37, 0
      %s40 = sadd.s32 %s39, 1
      %s41 = scalar_select %p38, %s39, %s40
      %p44 = pneg %p38
      %p45 = scmp.eq.s32.totalorder %s15, 1
      %p46 = por %p44, %p45
      %p47 = scmp.ne.s32.totalorder %s39, %s42
      %p48 = scmp.eq.s32.totalorder %s15, 0
      %p49 = por %p47, %p48
      %p50 = scmp.ne.s32.totalorder %s39, %s42
      %p51 = scmp.eq.s32.totalorder %s20, 1
      %p52 = por %p50, %p51
      %p53 = scmp.ne.s32.totalorder %s42, %s43
      %p54 = scmp.eq.s32.totalorder %s20, 0
      %p55 = por %p53, %p54
      %p56 = scmp.ne.s32.totalorder %s42, %s43
      %p57 = scmp.eq.s32.totalorder %s21, 1
      %p58 = por %p56, %p57
      %p60 = scmp.ne.s32.totalorder %s43, %s59
      %p61 = scmp.eq.s32.totalorder %s21, 0
      %p62 = por %p60, %p61
      %s63 = ssub.s32 %s22, %s34
      %s64 = ssub.s32 %s23, %s30
      %s65 = sor.u32 %s63, %s64
      %p66 = scmp.eq.s32.totalorder %s65, 0
      %s68 = sadd.s32 %s67, 1
      %s69 = scalar_select %p66, %s67, %s68
      %p72 = pneg %p66
      %p73 = scmp.eq.s32.totalorder %s15, 1
      %p74 = por %p72, %p73
      %p75 = scmp.ne.s32.totalorder %s67, %s70
      %p76 = scmp.eq.s32.totalorder %s15, 0
      %p77 = por %p75, %p76
      %p78 = scmp.ne.s32.totalorder %s67, %s70
      %p79 = scmp.eq.s32.totalorder %s20, 1
      %p80 = por %p78, %p79
      %p81 = scmp.ne.s32.totalorder %s70, %s71
      %p82 = scmp.eq.s32.totalorder %s20, 0
      %p83 = por %p81, %p82
      %p84 = scmp.ne.s32.totalorder %s70, %s71
      %p85 = scmp.eq.s32.totalorder %s21, 1
      %p86 = por %p84, %p85
      %p88 = scmp.ne.s32.totalorder %s71, %s87
      %p89 = scmp.eq.s32.totalorder %s21, 0
      %p90 = por %p88, %p89
      %s92 = sadd.s32 %s91, 1
      %p95 = scmp.eq.s32.totalorder %s15, 1
      %p96 = scmp.ne.s32.totalorder %s91, %s93
      %p97 = scmp.eq.s32.totalorder %s15, 0
      %p98 = por %p96, %p97
      %p99 = scmp.ne.s32.totalorder %s91, %s93
      %p100 = scmp.eq.s32.totalorder %s20, 1
      %p101 = por %p99, %p100
      %p102 = scmp.ne.s32.totalorder %s93, %s94
      %p103 = scmp.eq.s32.totalorder %s20, 0
      %p104 = por %p102, %p103
      %p105 = scmp.ne.s32.totalorder %s93, %s94
      %p106 = scmp.eq.s32.totalorder %s21, 1
      %p107 = por %p105, %p106
      %p109 = scmp.ne.s32.totalorder %s94, %s108
      %p110 = scmp.eq.s32.totalorder %s21, 0
      %p111 = por %p109, %p110
      %p112 = scmp.le.s32.totalorder 1, %s15
      %p113 = scmp.lt.s32.totalorder %s15, 3
      %p114 = pnand %p112, %p113
      %p115 = pneg %p114
      // Predicated region
      $region9: #{tpu_custom_call.1} parent=5 // pred_check
        _
      $region10: #{tpu_custom_call.1} parent=5 // pred_check_branch
        %117 = sbr.rel (%p114) target = $region12
      $region11: #{tpu_custom_call.1} parent=5 // pred_region
        %s118 = ssub.s32 %s15, 1
      $region12: #{tpu_custom_call.1} parent=5 // pred_fallthru
        _
      %p119 = scmp.lt.s32.totalorder %s15, 2
      // Predicated region
      $region13: #{tpu_custom_call.1} parent=5 // pred_check
        %p120 = pneg %p119
      $region14: #{tpu_custom_call.1} parent=5 // pred_check_branch
        %122 = sbr.rel (%p120) target = $region16
      $region15: #{tpu_custom_call.1} parent=5 // pred_region
        // Predicated region
        $region17: #{tpu_custom_call.1} parent=15 // pred_check
          %p123 = pneg %p49
        $region18: #{tpu_custom_call.1} parent=15 // pred_check_branch
          %125 = sbr.rel (%p123) target = $region20
        $region19: #{tpu_custom_call.1} parent=15 // pred_region
          %s126 = sand.u32 %s39, 1
          %s127 = scalar_lea.sflag [#allocation9], %s126
          %s128 = sand.u32 %s39, 1
          %s129 = smul.addr %s128, 16
          %s130 = scalar_lea.vmem [#allocation8], %s129
          %s131 = smul.u32 2, %s23
          %s133 = ssub.s32 256, 256
          %134 = vsyncadd %s127, %s133
          %s135 = smul.addr %s22, 4
          %s136 = sadd.s32 %s131, %s135
          %s137 = smul.addr %s136, 128
          %s138 = scalar_lea.hbm %s0, %s137
          %s140 = sshll.u32 %s130, 4
          %s141 = int_to_ptr.vmem [resolvable:$true] %s140
          %143 = dma.hbm_to_vmem [thread:$0]  %s138, 256, %s141, %s127
        $region20: #{tpu_custom_call.1} parent=15 // pred_fallthru
          _
        // Predicated region
        $region21: #{tpu_custom_call.1} parent=15 // pred_check
          %p144 = pneg %p77
        $region22: #{tpu_custom_call.1} parent=15 // pred_check_branch
          %146 = sbr.rel (%p144) target = $region24
        $region23: #{tpu_custom_call.1} parent=15 // pred_region
          %s147 = sand.u32 %s67, 1
          %s148 = scalar_lea.sflag [#allocation12], %s147
          %s149 = sand.u32 %s67, 1
          %s150 = smul.addr %s149, 16
          %s151 = scalar_lea.vmem [#allocation11], %s150
          %s152 = smul.u32 2, %s23
          %s154 = ssub.s32 256, 256
          %155 = vsyncadd %s148, %s154
          %s156 = smul.addr %s22, 4
          %s157 = sadd.s32 %s152, %s156
          %s158 = smul.addr %s157, 128
          %s159 = scalar_lea.hbm %s1, %s158
          %s161 = sshll.u32 %s151, 4
          %s162 = int_to_ptr.vmem [resolvable:$true] %s161
          %164 = dma.hbm_to_vmem [thread:$0]  %s159, 256, %s162, %s148
        $region24: #{tpu_custom_call.1} parent=15 // pred_fallthru
          _
      $region16: #{tpu_custom_call.1} parent=5 // pred_fallthru
        _
      %p165 = scmp.le.s32.totalorder 1, %s15
      %p166 = scmp.lt.s32.totalorder %s15, 3
      %p167 = pnand %p165, %p166
      %p168 = pneg %p167
      // Predicated region
      $region25: #{tpu_custom_call.1} parent=5 // pred_check
        _
      $region26: #{tpu_custom_call.1} parent=5 // pred_check_branch
        %170 = sbr.rel (%p167) target = $region28
      $region27: #{tpu_custom_call.1} parent=5 // pred_region
        %s171 = ssub.s32 %s15, 1
        %s172 = sand.u32 %s42, 1
        %s173 = scalar_lea.sflag [#allocation9], %s172
        %s174 = sand.u32 %s42, 1
        %s175 = smul.addr %s174, 16
        %s176 = scalar_lea.vmem [#allocation8], %s175
        // Predicated region
        $region29: #{tpu_custom_call.1} parent=27 // pred_check
          %p177 = pneg %p55
        $region30: #{tpu_custom_call.1} parent=27 // pred_check_branch
          %179 = sbr.rel (%p177) target = $region32
        $region31: #{tpu_custom_call.1} parent=27 // pred_region
          %180 = dma.done %s173, 256
        $region32: #{tpu_custom_call.1} parent=27 // pred_fallthru
          _
        %s181 = sand.u32 %s70, 1
        %s182 = scalar_lea.sflag [#allocation12], %s181
        %s183 = sand.u32 %s70, 1
        %s184 = smul.addr %s183, 16
        %s185 = scalar_lea.vmem [#allocation11], %s184
        // Predicated region
        $region33: #{tpu_custom_call.1} parent=27 // pred_check
          %p186 = pneg %p83
        $region34: #{tpu_custom_call.1} parent=27 // pred_check_branch
          %188 = sbr.rel (%p186) target = $region36
        $region35: #{tpu_custom_call.1} parent=27 // pred_region
          %189 = dma.done %s182, 256
        $region36: #{tpu_custom_call.1} parent=27 // pred_fallthru
          _
        %s190 = sand.u32 %s42, 1
        %s191 = scalar_lea.sflag [#allocation9], %s190
        %s192 = sand.u32 %s42, 1
        %s193 = smul.addr %s192, 16
        %s194 = scalar_lea.vmem [#allocation8], %s193
        %p195 = pneg %p55
        %p196 = pneg %p52
        %s197 = sand.u32 %s70, 1
        %s198 = scalar_lea.sflag [#allocation12], %s197
        %s199 = sand.u32 %s70, 1
        %s200 = smul.addr %s199, 16
        %s201 = scalar_lea.vmem [#allocation11], %s200
        %p202 = pneg %p83
        %p203 = pneg %p80
        %p204 = pneg %p104
        %p205 = pneg %p101
        %s206 = smul.u32 2, %s25
        %s207 = smul.u32 2, %s25
        %p208 = scmp.eq.s32.totalorder %s24, 0
        %p209 = scmp.eq.s32.totalorder %s25, 0
        %p210 = pnand %p208, %p209
        %p211 = pneg %p210
        // Predicated region
        $region37: #{tpu_custom_call.1} parent=27 // pred_check
          _
        $region38: #{tpu_custom_call.1} parent=27 // pred_check_branch
          %213 = sbr.rel (%p210) target = $region40
        $region39: #{tpu_custom_call.1} parent=27 // pred_region
          %s214 = scalar_lea.smem [#allocation7], 0
          %215 = sst [smem:[%s214]] 0.0
        $region40: #{tpu_custom_call.1} parent=27 // pred_fallthru
          _
        // Predicated region
        $region41: #{tpu_custom_call.1} parent=27 // pred_check
          %p216 = pneg %p209
        $region42: #{tpu_custom_call.1} parent=27 // pred_check_branch
          %218 = sbr.rel (%p216) target = $region44
        $region43: #{tpu_custom_call.1} parent=27 // pred_region
          %vm219 = vcmask 7168
          %220 = vst.msk [vmem:[#allocation2] sm:$0xff] %vm219, 0.0
          %221 = vst.msk [vmem:[#allocation3] sm:$0xff] %vm219, 0.0
          %222 = vst.msk [vmem:[#allocation4] sm:$0xff] %vm219, 0.0
          %223 = vst.msk [vmem:[#allocation5] sm:$0xff] %vm219, 0.0
          %224 = vst.msk [vmem:[#allocation6] sm:$0xff] %vm219, 0.0
        $region44: #{tpu_custom_call.1} parent=27 // pred_fallthru
          _
        %v225 = vld [vmem:[%s176] sm:$0xff]
        %v226 = vld [vmem:[%s176 + $0x8] sm:$0xff]
        %v227 = vld [vmem:[%s185] sm:$0xff]
        %v228 = vld [vmem:[%s185 + $0x8] sm:$0xff]
        %v229 = vld [vmem:[#allocation2] sm:$0xff]
        %v230 = vadd.f32 %v225, %v226
        %231 = vadd.xlane.f32.xlu0 %v230
        %v232 = vpop.xlane.xlu0 %231
        %v233 = vadd.f32 %v229, %v232
        %vm234 = vcmask 7168
        %235 = vst.msk [vmem:[#allocation2] sm:$0xff] %vm234, %v233
        %v236 = vld [vmem:[#allocation3] sm:$0xff]
        %v237 = vadd.f32 %v227, %v228
        %238 = vadd.xlane.f32.xlu0 %v237
        %v239 = vpop.xlane.xlu0 %238
        %v240 = vadd.f32 %v236, %v239
        %241 = vst.msk [vmem:[#allocation3] sm:$0xff] %vm234, %v240
        %v242 = vld [vmem:[#allocation4] sm:$0xff]
        %v243 = vmul.f32 %v225, %v227
        %v244 = vmul.f32 %v226, %v228
        %v245 = vadd.f32 %v243, %v244
        %246 = vadd.xlane.f32.xlu0 %v245
        %v247 = vpop.xlane.xlu0 %246
        %v248 = vadd.f32 %v242, %v247
        %249 = vst.msk [vmem:[#allocation4] sm:$0xff] %vm234, %v248
        %v250 = vld [vmem:[#allocation5] sm:$0xff]
        %v251 = vmul.f32 %v225, %v225
        %v252 = vmul.f32 %v226, %v226
        %v253 = vadd.f32 %v251, %v252
        %254 = vadd.xlane.f32.xlu0 %v253
        %v255 = vpop.xlane.xlu0 %254
        %v256 = vadd.f32 %v250, %v255
        %257 = vst.msk [vmem:[#allocation5] sm:$0xff] %vm234, %v256
        %v258 = vld [vmem:[#allocation6] sm:$0xff]
        %v259 = vmul.f32 %v227, %v227
        %v260 = vmul.f32 %v228, %v228
        %v261 = vadd.f32 %v259, %v260
        %262 = vadd.xlane.f32.xlu0 %v261
        %v263 = vpop.xlane.xlu0 %262
        %v264 = vadd.f32 %v258, %v263
        %265 = vst.msk [vmem:[#allocation6] sm:$0xff] %vm234, %v264
        %p266 = scmp.eq.s32.totalorder %s25, 1
        // Predicated region
        $region45: #{tpu_custom_call.1} parent=27 // pred_check
          %p267 = pneg %p266
        $region46: #{tpu_custom_call.1} parent=27 // pred_check_branch
          %269 = sbr.rel (%p267) target = $region48
        $region47: #{tpu_custom_call.1} parent=27 // pred_region
          %v270 = vlaneseq
          %v271 = vshrl.u32 %v270, 7
          %v272 = vlaneseq
          %v273 = vand.u32 %v272, 127
          %v274 = vmul.u32 %v271, 4
          %vm275 = vcmp.ge.s32.totalorder %v273, %v274
          %v276 = vadd.s32 %v271, 1
          %v277 = vmul.u32 %v276, 4
          %vm278 = vcmp.lt.s32.totalorder %v273, %v277
          %vm279 = vmand %vm275, %vm278
          %v280 = vsel %vm279, 1, 0
          %v281 = vcvt.s32.f32 %v280
          %v282 = vld [vmem:[#allocation2] sm:$0xff]
          %vm283 = vcmask 64512
          %v285 = vsel %vm283, %v281, 0
          %287 = vmatprep.subr.mxu0 0.0
          %288 = vmatpush1.msra.mxu0 0.0
          %289 = vmatprep.subr.mxu0 0.0
          %290 = vmatpush1.msra.mxu0 0.0
          %291 = vmatprep.subr.mxu0 0.0
          %292 = vmatpush1.msra.mxu0 0.0
          %293 = vmatprep.subr.mxu0 0.0
          %294 = vmatpush1.msra.mxu0 0.0
          %295 = vmatprep.subr.mxu0 0.0
          %296 = vmatpush1.msra.mxu0 0.0
          %297 = vmatprep.subr.mxu0 0.0
          %298 = vmatpush1.msra.mxu0 0.0
          %299 = vmatprep.subr.mxu0 0.0
          %300 = vmatpush1.msra.mxu0 0.0
          %301 = vmatprep.subr.mxu0 0.0
          %302 = vmatpush1.msra.mxu0 0.0
          %303 = vmatprep.subr.mxu0 0.0
          %304 = vmatpush1.msra.mxu0 0.0
          %305 = vmatprep.subr.mxu0 0.0
          %306 = vmatpush1.msra.mxu0 0.0
          %307 = vmatprep.subr.mxu0 0.0
          %308 = vmatpush1.msra.mxu0 0.0
          %309 = vmatprep.subr.mxu0 0.0
          %310 = vmatpush1.msra.mxu0 0.0
          %311 = vmatprep.subr.mxu0 0.0
          %312 = vmatpush1.msra.mxu0 0.0
          %313 = vmatprep.subr.mxu0 0.0
          %314 = vmatpush1.msra.mxu0 0.0
          %315 = vmatprep.subr.mxu0 0.0
          %316 = vmatpush1.msra.mxu0 0.0
          %317 = vmatprep.subr.mxu0 0.0
          %318 = vmatpush1.msra.mxu0 %v282
          %319 = vmatprep.subr.mxu0 0.0
          %320 = vmatpush2.msra.mxu0 0.0
          %321 = vmatprep.subr.mxu0 0.0
          %322 = vmatpush2.msra.mxu0 0.0
          %323 = vmatprep.subr.mxu0 0.0
          %324 = vmatpush2.msra.mxu0 0.0
          %325 = vmatprep.subr.mxu0 0.0
          %326 = vmatpush2.msra.mxu0 0.0
          %327 = vmatprep.subr.mxu0 0.0
          %328 = vmatpush2.msra.mxu0 0.0
          %329 = vmatprep.subr.mxu0 0.0
          %330 = vmatpush2.msra.mxu0 0.0
          %331 = vmatprep.subr.mxu0 0.0
          %332 = vmatpush2.msra.mxu0 0.0
          %333 = vmatprep.subr.mxu0 0.0
          %334 = vmatpush2.msra.mxu0 0.0
          %335 = vmatprep.subr.mxu0 0.0
          %336 = vmatpush2.msra.mxu0 0.0
          %337 = vmatprep.subr.mxu0 0.0
          %338 = vmatpush2.msra.mxu0 0.0
          %339 = vmatprep.subr.mxu0 0.0
          %340 = vmatpush2.msra.mxu0 0.0
          %341 = vmatprep.subr.mxu0 0.0
          %342 = vmatpush2.msra.mxu0 0.0
          %343 = vmatprep.subr.mxu0 0.0
          %344 = vmatpush2.msra.mxu0 0.0
          %345 = vmatprep.subr.mxu0 0.0
          %346 = vmatpush2.msra.mxu0 0.0
          %347 = vmatprep.subr.mxu0 0.0
          %348 = vmatpush2.msra.mxu0 0.0
          %349 = vmatprep.subr.mxu0 0.0
          %350 = vmatpush2.msra.mxu0 0.0
          %351 = vmatprep.mubr.f32.mxu0 0.0
          %352 = vmatmul.mubr.f32.gmra.mxu0 %v285
          %v353 = vpop.f32.mrf.mxu0
          %v354 = vadd.f32 0.0, %v353
          %v355 = vpop.f32.mrf.mxu0
          %356 = vdwg.mxu0
          %v357 = vld [vmem:[#allocation3] sm:$0xff]
          %358 = vmatprep.subr.mxu0 0.0
          %359 = vmatpush1.msra.mxu0 0.0
          %360 = vmatprep.subr.mxu0 0.0
          %361 = vmatpush1.msra.mxu0 0.0
          %362 = vmatprep.subr.mxu0 0.0
          %363 = vmatpush1.msra.mxu0 0.0
          %364 = vmatprep.subr.mxu0 0.0
          %365 = vmatpush1.msra.mxu0 0.0
          %366 = vmatprep.subr.mxu0 0.0
          %367 = vmatpush1.msra.mxu0 0.0
          %368 = vmatprep.subr.mxu0 0.0
          %369 = vmatpush1.msra.mxu0 0.0
          %370 = vmatprep.subr.mxu0 0.0
          %371 = vmatpush1.msra.mxu0 0.0
          %372 = vmatprep.subr.mxu0 0.0
          %373 = vmatpush1.msra.mxu0 0.0
          %374 = vmatprep.subr.mxu0 0.0
          %375 = vmatpush1.msra.mxu0 0.0
          %376 = vmatprep.subr.mxu0 0.0
          %377 = vmatpush1.msra.mxu0 0.0
          %378 = vmatprep.subr.mxu0 0.0
          %379 = vmatpush1.msra.mxu0 0.0
          %380 = vmatprep.subr.mxu0 0.0
          %381 = vmatpush1.msra.mxu0 0.0
          %382 = vmatprep.subr.mxu0 0.0
          %383 = vmatpush1.msra.mxu0 0.0
          %384 = vmatprep.subr.mxu0 0.0
          %385 = vmatpush1.msra.mxu0 0.0
          %386 = vmatprep.subr.mxu0 0.0
          %387 = vmatpush1.msra.mxu0 0.0
          %388 = vmatprep.subr.mxu0 0.0
          %389 = vmatpush1.msra.mxu0 %v357
          %390 = vmatprep.subr.mxu0 0.0
          %391 = vmatpush2.msra.mxu0 0.0
          %392 = vmatprep.subr.mxu0 0.0
          %393 = vmatpush2.msra.mxu0 0.0
          %394 = vmatprep.subr.mxu0 0.0
          %395 = vmatpush2.msra.mxu0 0.0
          %396 = vmatprep.subr.mxu0 0.0
          %397 = vmatpush2.msra.mxu0 0.0
          %398 = vmatprep.subr.mxu0 0.0
          %399 = vmatpush2.msra.mxu0 0.0
          %400 = vmatprep.subr.mxu0 0.0
          %401 = vmatpush2.msra.mxu0 0.0
          %402 = vmatprep.subr.mxu0 0.0
          %403 = vmatpush2.msra.mxu0 0.0
          %404 = vmatprep.subr.mxu0 0.0
          %405 = vmatpush2.msra.mxu0 0.0
          %406 = vmatprep.subr.mxu0 0.0
          %407 = vmatpush2.msra.mxu0 0.0
          %408 = vmatprep.subr.mxu0 0.0
          %409 = vmatpush2.msra.mxu0 0.0
          %410 = vmatprep.subr.mxu0 0.0
          %411 = vmatpush2.msra.mxu0 0.0
          %412 = vmatprep.subr.mxu0 0.0
          %413 = vmatpush2.msra.mxu0 0.0
          %414 = vmatprep.subr.mxu0 0.0
          %415 = vmatpush2.msra.mxu0 0.0
          %416 = vmatprep.subr.mxu0 0.0
          %417 = vmatpush2.msra.mxu0 0.0
          %418 = vmatprep.subr.mxu0 0.0
          %419 = vmatpush2.msra.mxu0 0.0
          %420 = vmatprep.subr.mxu0 0.0
          %421 = vmatpush2.msra.mxu0 0.0
          %422 = vmatprep.mubr.f32.mxu0 0.0
          %423 = vmatmul.mubr.f32.gmra.mxu0 %v285
          %v424 = vpop.f32.mrf.mxu0
          %v425 = vadd.f32 0.0, %v424
          %v426 = vpop.f32.mrf.mxu0
          %427 = vdwg.mxu0
          %v428 = vld [vmem:[#allocation4] sm:$0xff]
          %429 = vmatprep.subr.mxu0 0.0
          %430 = vmatpush1.msra.mxu0 0.0
          %431 = vmatprep.subr.mxu0 0.0
          %432 = vmatpush1.msra.mxu0 0.0
          %433 = vmatprep.subr.mxu0 0.0
          %434 = vmatpush1.msra.mxu0 0.0
          %435 = vmatprep.subr.mxu0 0.0
          %436 = vmatpush1.msra.mxu0 0.0
          %437 = vmatprep.subr.mxu0 0.0
          %438 = vmatpush1.msra.mxu0 0.0
          %439 = vmatprep.subr.mxu0 0.0
          %440 = vmatpush1.msra.mxu0 0.0
          %441 = vmatprep.subr.mxu0 0.0
          %442 = vmatpush1.msra.mxu0 0.0
          %443 = vmatprep.subr.mxu0 0.0
          %444 = vmatpush1.msra.mxu0 0.0
          %445 = vmatprep.subr.mxu0 0.0
          %446 = vmatpush1.msra.mxu0 0.0
          %447 = vmatprep.subr.mxu0 0.0
          %448 = vmatpush1.msra.mxu0 0.0
          %449 = vmatprep.subr.mxu0 0.0
          %450 = vmatpush1.msra.mxu0 0.0
          %451 = vmatprep.subr.mxu0 0.0
          %452 = vmatpush1.msra.mxu0 0.0
          %453 = vmatprep.subr.mxu0 0.0
          %454 = vmatpush1.msra.mxu0 0.0
          %455 = vmatprep.subr.mxu0 0.0
          %456 = vmatpush1.msra.mxu0 0.0
          %457 = vmatprep.subr.mxu0 0.0
          %458 = vmatpush1.msra.mxu0 0.0
          %459 = vmatprep.subr.mxu0 0.0
          %460 = vmatpush1.msra.mxu0 %v428
          %461 = vmatprep.subr.mxu0 0.0
          %462 = vmatpush2.msra.mxu0 0.0
          %463 = vmatprep.subr.mxu0 0.0
          %464 = vmatpush2.msra.mxu0 0.0
          %465 = vmatprep.subr.mxu0 0.0
          %466 = vmatpush2.msra.mxu0 0.0
          %467 = vmatprep.subr.mxu0 0.0
          %468 = vmatpush2.msra.mxu0 0.0
          %469 = vmatprep.subr.mxu0 0.0
          %470 = vmatpush2.msra.mxu0 0.0
          %471 = vmatprep.subr.mxu0 0.0
          %472 = vmatpush2.msra.mxu0 0.0
          %473 = vmatprep.subr.mxu0 0.0
          %474 = vmatpush2.msra.mxu0 0.0
          %475 = vmatprep.subr.mxu0 0.0
          %476 = vmatpush2.msra.mxu0 0.0
          %477 = vmatprep.subr.mxu0 0.0
          %478 = vmatpush2.msra.mxu0 0.0
          %479 = vmatprep.subr.mxu0 0.0
          %480 = vmatpush2.msra.mxu0 0.0
          %481 = vmatprep.subr.mxu0 0.0
          %482 = vmatpush2.msra.mxu0 0.0
          %483 = vmatprep.subr.mxu0 0.0
          %484 = vmatpush2.msra.mxu0 0.0
          %485 = vmatprep.subr.mxu0 0.0
          %486 = vmatpush2.msra.mxu0 0.0
          %487 = vmatprep.subr.mxu0 0.0
          %488 = vmatpush2.msra.mxu0 0.0
          %489 = vmatprep.subr.mxu0 0.0
          %490 = vmatpush2.msra.mxu0 0.0
          %491 = vmatprep.subr.mxu0 0.0
          %492 = vmatpush2.msra.mxu0 0.0
          %493 = vmatprep.mubr.f32.mxu0 0.0
          %494 = vmatmul.mubr.f32.gmra.mxu0 %v285
          %v495 = vpop.f32.mrf.mxu0
          %v496 = vadd.f32 0.0, %v495
          %v497 = vpop.f32.mrf.mxu0
          %498 = vdwg.mxu0
          %v499 = vld [vmem:[#allocation5] sm:$0xff]
          %500 = vmatprep.subr.mxu0 0.0
          %501 = vmatpush1.msra.mxu0 0.0
          %502 = vmatprep.subr.mxu0 0.0
          %503 = vmatpush1.msra.mxu0 0.0
          %504 = vmatprep.subr.mxu0 0.0
          %505 = vmatpush1.msra.mxu0 0.0
          %506 = vmatprep.subr.mxu0 0.0
          %507 = vmatpush1.msra.mxu0 0.0
          %508 = vmatprep.subr.mxu0 0.0
          %509 = vmatpush1.msra.mxu0 0.0
          %510 = vmatprep.subr.mxu0 0.0
          %511 = vmatpush1.msra.mxu0 0.0
          %512 = vmatprep.subr.mxu0 0.0
          %513 = vmatpush1.msra.mxu0 0.0
          %514 = vmatprep.subr.mxu0 0.0
          %515 = vmatpush1.msra.mxu0 0.0
          %516 = vmatprep.subr.mxu0 0.0
          %517 = vmatpush1.msra.mxu0 0.0
          %518 = vmatprep.subr.mxu0 0.0
          %519 = vmatpush1.msra.mxu0 0.0
          %520 = vmatprep.subr.mxu0 0.0
          %521 = vmatpush1.msra.mxu0 0.0
          %522 = vmatprep.subr.mxu0 0.0
          %523 = vmatpush1.msra.mxu0 0.0
          %524 = vmatprep.subr.mxu0 0.0
          %525 = vmatpush1.msra.mxu0 0.0
          %526 = vmatprep.subr.mxu0 0.0
          %527 = vmatpush1.msra.mxu0 0.0
          %528 = vmatprep.subr.mxu0 0.0
          %529 = vmatpush1.msra.mxu0 0.0
          %530 = vmatprep.subr.mxu0 0.0
          %531 = vmatpush1.msra.mxu0 %v499
          %532 = vmatprep.subr.mxu0 0.0
          %533 = vmatpush2.msra.mxu0 0.0
          %534 = vmatprep.subr.mxu0 0.0
          %535 = vmatpush2.msra.mxu0 0.0
          %536 = vmatprep.subr.mxu0 0.0
          %537 = vmatpush2.msra.mxu0 0.0
          %538 = vmatprep.subr.mxu0 0.0
          %539 = vmatpush2.msra.mxu0 0.0
          %540 = vmatprep.subr.mxu0 0.0
          %541 = vmatpush2.msra.mxu0 0.0
          %542 = vmatprep.subr.mxu0 0.0
          %543 = vmatpush2.msra.mxu0 0.0
          %544 = vmatprep.subr.mxu0 0.0
          %545 = vmatpush2.msra.mxu0 0.0
          %546 = vmatprep.subr.mxu0 0.0
          %547 = vmatpush2.msra.mxu0 0.0
          %548 = vmatprep.subr.mxu0 0.0
          %549 = vmatpush2.msra.mxu0 0.0
          %550 = vmatprep.subr.mxu0 0.0
          %551 = vmatpush2.msra.mxu0 0.0
          %552 = vmatprep.subr.mxu0 0.0
          %553 = vmatpush2.msra.mxu0 0.0
          %554 = vmatprep.subr.mxu0 0.0
          %555 = vmatpush2.msra.mxu0 0.0
          %556 = vmatprep.subr.mxu0 0.0
          %557 = vmatpush2.msra.mxu0 0.0
          %558 = vmatprep.subr.mxu0 0.0
          %559 = vmatpush2.msra.mxu0 0.0
          %560 = vmatprep.subr.mxu0 0.0
          %561 = vmatpush2.msra.mxu0 0.0
          %562 = vmatprep.subr.mxu0 0.0
          %563 = vmatpush2.msra.mxu0 0.0
          %564 = vmatprep.mubr.f32.mxu0 0.0
          %565 = vmatmul.mubr.f32.gmra.mxu0 %v285
          %v566 = vpop.f32.mrf.mxu0
          %v567 = vadd.f32 0.0, %v566
          %v568 = vpop.f32.mrf.mxu0
          %569 = vdwg.mxu0
          %v570 = vld [vmem:[#allocation6] sm:$0xff]
          %571 = vmatprep.subr.mxu0 0.0
          %572 = vmatpush1.msra.mxu0 0.0
          %573 = vmatprep.subr.mxu0 0.0
          %574 = vmatpush1.msra.mxu0 0.0
          %575 = vmatprep.subr.mxu0 0.0
          %576 = vmatpush1.msra.mxu0 0.0
          %577 = vmatprep.subr.mxu0 0.0
          %578 = vmatpush1.msra.mxu0 0.0
          %579 = vmatprep.subr.mxu0 0.0
          %580 = vmatpush1.msra.mxu0 0.0
          %581 = vmatprep.subr.mxu0 0.0
          %582 = vmatpush1.msra.mxu0 0.0
          %583 = vmatprep.subr.mxu0 0.0
          %584 = vmatpush1.msra.mxu0 0.0
          %585 = vmatprep.subr.mxu0 0.0
          %586 = vmatpush1.msra.mxu0 0.0
          %587 = vmatprep.subr.mxu0 0.0
          %588 = vmatpush1.msra.mxu0 0.0
          %589 = vmatprep.subr.mxu0 0.0
          %590 = vmatpush1.msra.mxu0 0.0
          %591 = vmatprep.subr.mxu0 0.0
          %592 = vmatpush1.msra.mxu0 0.0
          %593 = vmatprep.subr.mxu0 0.0
          %594 = vmatpush1.msra.mxu0 0.0
          %595 = vmatprep.subr.mxu0 0.0
          %596 = vmatpush1.msra.mxu0 0.0
          %597 = vmatprep.subr.mxu0 0.0
          %598 = vmatpush1.msra.mxu0 0.0
          %599 = vmatprep.subr.mxu0 0.0
          %600 = vmatpush1.msra.mxu0 0.0
          %601 = vmatprep.subr.mxu0 0.0
          %602 = vmatpush1.msra.mxu0 %v570
          %603 = vmatprep.subr.mxu0 0.0
          %604 = vmatpush2.msra.mxu0 0.0
          %605 = vmatprep.subr.mxu0 0.0
          %606 = vmatpush2.msra.mxu0 0.0
          %607 = vmatprep.subr.mxu0 0.0
          %608 = vmatpush2.msra.mxu0 0.0
          %609 = vmatprep.subr.mxu0 0.0
          %610 = vmatpush2.msra.mxu0 0.0
          %611 = vmatprep.subr.mxu0 0.0
          %612 = vmatpush2.msra.mxu0 0.0
          %613 = vmatprep.subr.mxu0 0.0
          %614 = vmatpush2.msra.mxu0 0.0
          %615 = vmatprep.subr.mxu0 0.0
          %616 = vmatpush2.msra.mxu0 0.0
          %617 = vmatprep.subr.mxu0 0.0
          %618 = vmatpush2.msra.mxu0 0.0
          %619 = vmatprep.subr.mxu0 0.0
          %620 = vmatpush2.msra.mxu0 0.0
          %621 = vmatprep.subr.mxu0 0.0
          %622 = vmatpush2.msra.mxu0 0.0
          %623 = vmatprep.subr.mxu0 0.0
          %624 = vmatpush2.msra.mxu0 0.0
          %625 = vmatprep.subr.mxu0 0.0
          %626 = vmatpush2.msra.mxu0 0.0
          %627 = vmatprep.subr.mxu0 0.0
          %628 = vmatpush2.msra.mxu0 0.0
          %629 = vmatprep.subr.mxu0 0.0
          %630 = vmatpush2.msra.mxu0 0.0
          %631 = vmatprep.subr.mxu0 0.0
          %632 = vmatpush2.msra.mxu0 0.0
          %633 = vmatprep.subr.mxu0 0.0
          %634 = vmatpush2.msra.mxu0 0.0
          %635 = vmatprep.mubr.f32.mxu0 0.0
          %636 = vmatmul.mubr.f32.gmra.mxu0 %v285
          %v637 = vpop.f32.mrf.mxu0
          %v638 = vadd.f32 0.0, %v637
          %v639 = vpop.f32.mrf.mxu0
          %640 = vdwg.mxu0
          %v641 = vmul.f32 %v496, 2048.0
          %v642 = vmul.f32 %v354, %v425
          %v643 = vsub.f32 %v641, %v642
          %v644 = vmul.f32 %v567, 2048.0
          %v645 = vmul.f32 %v354, %v354
          %v646 = vsub.f32 %v644, %v645
          %v647 = vmul.f32 %v638, 2048.0
          %v648 = vmul.f32 %v425, %v425
          %v649 = vsub.f32 %v647, %v648
          %v650 = vmul.f32 %v646, %v649
          %v651 = vrsqrt.pop %v650
          %v652 = vmul.f32 %v643, %v651
          %v653 = vsub.f32 1.0, %v652
          %vm654 = vcmask 1024
          %v655 = vsel %vm654, %v653, 0.0
          %656 = vadd.xlane.f32.xlu0 %v655
          %v657 = vpop.xlane.xlu0 %656
          %v658 = vrot.slane %v657, 4
          %v659 = vadd.f32 %v657, %v658
          %v660 = vrot.slane %v659, 2
          %v661 = vadd.f32 %v659, %v660
          %v662 = vrot.slane %v661, 1
          %v663 = vadd.f32 %v661, %v662
          %s664 = vtos %v663
          %s665 = sld [smem:[#allocation7]]
          %s666 = sadd.f32 %s665, %s664
          %s667 = scalar_lea.smem [#allocation7], 0
          %668 = sst [smem:[%s667]] %s666
          // Predicated region
          $region49: #{tpu_custom_call.1} parent=47 // pred_check
            %p669 = pneg %p208
          $region50: #{tpu_custom_call.1} parent=47 // pred_check_branch
            %671 = sbr.rel (%p669) target = $region52
          $region51: #{tpu_custom_call.1} parent=47 // pred_region
            %v672 = vrcp.pop 2.0
            %s673 = vtos %v672
            %s674 = smul.f32 %s666, %s673
            %s675 = scalar_lea.smem [#allocation13], 0
            %676 = sst [smem:[%s675]] %s674
          $region52: #{tpu_custom_call.1} parent=47 // pred_fallthru
            _
        $region48: #{tpu_custom_call.1} parent=27 // pred_fallthru
          _
        // Predicated region
        $region53: #{tpu_custom_call.1} parent=27 // pred_check
          %p677 = pneg %p101
        $region54: #{tpu_custom_call.1} parent=27 // pred_check_branch
          %679 = sbr.rel (%p677) target = $region56
        $region55: #{tpu_custom_call.1} parent=27 // pred_region
          %s681 = ssub.s32 16, 16
          %682 = vsyncadd [#allocation10], %s681
          %685 = dma.smem_to_hbm [#allocation13], 16, %s2, [#allocation10]
        $region56: #{tpu_custom_call.1} parent=27 // pred_fallthru
          _
        // Predicated region
        $region57: #{tpu_custom_call.1} parent=27 // pred_check
          %p686 = pneg %p101
        $region58: #{tpu_custom_call.1} parent=27 // pred_check_branch
          %688 = sbr.rel (%p686) target = $region60
        $region59: #{tpu_custom_call.1} parent=27 // pred_region
          %689 = dma.done [#allocation10], 16
        $region60: #{tpu_custom_call.1} parent=27 // pred_fallthru
          _
        %690 = sfence
      $region28: #{tpu_custom_call.1} parent=5 // pred_fallthru
        _
      %p691 = scmp.le.s32.totalorder 2, %s15
      // Predicated region
      $region61: #{tpu_custom_call.1} parent=5 // pred_check
        %p692 = pneg %p691
      $region62: #{tpu_custom_call.1} parent=5 // pred_check_branch
        %694 = sbr.rel (%p692) target = $region64
      $region63: #{tpu_custom_call.1} parent=5 // pred_region
        %s695 = ssub.s32 %s15, 2
      $region64: #{tpu_custom_call.1} parent=5 // pred_fallthru
        _
    $region6: #{tpu_custom_call.1} parent=1 // loop_footer
      %s19 = sadd.s32 1, %s15
    $region7: #{tpu_custom_call.1} parent=1 // loop_footer_branch
      %14 = sbr.rel target = $region3
    $region8: #{tpu_custom_call.1} parent=1 // loop_exit
      _
    %696 = vsyncpa [#allocation9], 1
    %s697 = scalar_lea.sflag [#allocation9], 1
    %698 = vsyncpa %s697, 1
    %699 = vsyncpa [#allocation12], 1
    %s700 = scalar_lea.sflag [#allocation12], 1
    %701 = vsyncpa %s700, 1
    %702 = vsyncpa [#allocation10], 1
    %s703 = scalar_lea.sflag [#allocation10], 1
    %704 = vsyncpa %s703, 1

</llo_original>
